<compile_context>
chip_gen: v6e
topology: v6e:2x2x1
jax: 0.10.0
libtpu: 0.0.40
codegen_flags: <defaults>
</compile_context>

<pallas_src>
import functools

import jax
import jax.numpy as jnp
from jax.experimental import pallas as pl
from jax.experimental.pallas import tpu as pltpu


def _round_up(x: int, m: int) -> int:
    return ((x + m - 1) // m) * m


# ----------------------------- Pallas kernel -------------------------------

def _bpr_score_kernel(u_ref, vt_ref, o_ref, acc_ref):
    # u_ref:  (tm, tk) bf16 user-embedding tile
    # vt_ref: (tk, tn) bf16 target-item-embedding tile (already transposed)
    # o_ref:  (tm, tn) f32 score tile
    # acc_ref:(tm, tn) f32 accumulator scratch (resident across the K axis)
    k = pl.program_id(2)

    @pl.when(k == 0)
    def _():
        acc_ref[...] = jnp.zeros_like(acc_ref)

    acc_ref[...] += jnp.dot(
        u_ref[...], vt_ref[...], preferred_element_type=jnp.float32
    )

    @pl.when(k == pl.num_programs(2) - 1)
    def _():
        o_ref[...] = acc_ref[...].astype(o_ref.dtype)


def bpr_score(user_ebd: jax.Array, tgt_ebd: jax.Array) -> jax.Array:
    """score = user_ebd @ tgt_ebd.T  (f32 output, bf16 MXU inputs).

    user_ebd: (B, D), tgt_ebd: (M, D). Arrays are padded to tile multiples so
    every block is (8,128)-aligned and the output lane dim is >=128.
    """
    B, D = user_ebd.shape
    M, D2 = tgt_ebd.shape
    assert D == D2

    # bf16 inputs for the MXU; f32 accumulate inside the kernel.
    u = user_ebd.astype(jnp.bfloat16)
    vt = tgt_ebd.astype(jnp.bfloat16).T          # (D, M): no on-chip transpose

    # Tile sizes: lane-dense N tile (>=128), bf16-friendly M tile (mult of 16),
    # K padded to >=128 so the contraction uses full MXU depth.
    tm = min(128, _round_up(B, 16))
    tn = min(512, _round_up(M, 128))
    tk = min(512, _round_up(D, 128))

    Bp = _round_up(B, tm)
    Mp = _round_up(M, tn)
    Dp = _round_up(D, tk)

    u = jnp.pad(u, ((0, Bp - B), (0, Dp - D)))
    vt = jnp.pad(vt, ((0, Dp - D), (0, Mp - M)))

    grid = (Bp // tm, Mp // tn, Dp // tk)

    out = pl.pallas_call(
        _bpr_score_kernel,
        out_shape=jax.ShapeDtypeStruct((Bp, Mp), jnp.float32),
        grid_spec=pltpu.PrefetchScalarGridSpec(
            num_scalar_prefetch=0,
            grid=grid,
            in_specs=[
                pl.BlockSpec((tm, tk), lambda i, j, k: (i, k)),
                pl.BlockSpec((tk, tn), lambda i, j, k: (k, j)),
            ],
            out_specs=pl.BlockSpec((tm, tn), lambda i, j, k: (i, j)),
            scratch_shapes=[pltpu.VMEM((tm, tn), jnp.float32)],
        ),
        compiler_params=pltpu.CompilerParams(
            dimension_semantics=("parallel", "parallel", "arbitrary"),
        ),
    )(u, vt)

    return out[:B, :M]


# ------------------------------ BPR module ---------------------------------

class BPRParams:
    """Deterministic parameter setup mirroring BPR.__init__."""

    def __init__(self, key, num_items: int, num_seqs: int, dims: int):
        self.num_items = num_items
        self.num_seqs = num_seqs
        self.dims = dims
        k_v, k_u = jax.random.split(key)
        std = 1.0 / dims
        V = jax.random.normal(k_v, (num_items, dims), jnp.float32) * std
        U = jax.random.normal(k_u, (num_seqs, dims), jnp.float32) * std
        # padding_idx=0 -> zero row
        self.V = V.at[0].set(0.0)
        self.U = U.at[0].set(0.0)


@jax.jit
def _forward_impl(U, V, user_indices, target_item_indices):
    # graph_convolution with graph layers commented out: g_ebd = cat(U, V)
    #   user_ebd = g_ebd[user_indices]              == U[user_indices]
    #   tgt_ebd  = g_ebd[num_seqs + item_indices]   == V[item_indices]
    user_ebd = jnp.take(U, user_indices, axis=0)                 # (B, D)
    tgt_ebd = jnp.take(V, target_item_indices, axis=0)           # (M, 1, D)
    tgt_ebd = jnp.squeeze(tgt_ebd, axis=1)                       # (M, D)
    # score = user_ebd.mm(tgt_ebd.t())  -> Pallas MXU matmul
    return bpr_score(user_ebd, tgt_ebd)                          # (B, M)


def bpr_forward(params: BPRParams, user_indices, item_seq_indices,
                target_item_indices, target_domain=0, pred_opt=''):
    # item_seq_indices / target_domain / pred_opt are unused in forward(),
    # kept for signature parity with the PyTorch module.
    del item_seq_indices, target_domain, pred_opt
    return _forward_impl(params.U, params.V, user_indices, target_item_indices)


# --------------------------------- main -------------------------------------

if __name__ == "__main__":
    key = jax.random.PRNGKey(0)
    k_param, k_user, k_seq, k_tgt = jax.random.split(key, 4)

    # Small synthetic config (args.num_items, args.num_seqs, args.dims)
    num_items, num_seqs, dims = 64, 32, 32
    B, L, M = 8, 8, 16  # batch, seq len, number of target items

    params = BPRParams(k_param, num_items=num_items, num_seqs=num_seqs, dims=dims)

    user_indices = jax.random.randint(k_user, (B,), 1, num_seqs, dtype=jnp.int32)
    item_seq_indices = jax.random.randint(k_seq, (B, L), 1, num_items, dtype=jnp.int32)
    # target_item_indices is (M, 1) so that tgt_ebd.squeeze(1) works as in torch
    target_item_indices = jax.random.randint(k_tgt, (M, 1), 1, num_items, dtype=jnp.int32)

    score = bpr_forward(params, user_indices, item_seq_indices,
                        target_item_indices, target_domain=0)
    score = jax.block_until_ready(score)
    assert score.shape == (B, M)

    # Reference in plain JAX with the same bf16-input / f32-accumulate math.
    u_ref = jnp.take(params.U, user_indices, axis=0)
    v_ref = jnp.take(params.V, target_item_indices[:, 0], axis=0)
    ref_bf16 = jnp.dot(
        u_ref.astype(jnp.bfloat16).astype(jnp.float32),
        v_ref.astype(jnp.bfloat16).astype(jnp.float32).T,
    )
    assert jnp.allclose(score, ref_bf16, atol=1e-4, rtol=1e-3)

    # Loose sanity check against the full-f32 reference (bf16 quantization only).
    ref_f32 = u_ref @ v_ref.T
    assert jnp.allclose(score, ref_f32, atol=5e-3, rtol=5e-2)

    print("KERNEL_OK")
</pallas_src>

<mosaic_0001>
module attributes {stable_mosaic.version = 11 : i64} {
  func.func @_bpr_score_kernel(%arg0: i32, %arg1: i32, %arg2: i32, %arg3: memref<16x128xbf16, #tpu.memory_space<vmem>>, %arg4: memref<128x128xbf16, #tpu.memory_space<vmem>>, %arg5: memref<16x128xf32, #tpu.memory_space<vmem>>, %arg6: memref<16x128xf32, #tpu.memory_space<vmem>>) attributes {dimension_semantics = [#tpu.dimension_semantics<parallel>, #tpu.dimension_semantics<parallel>, #tpu.dimension_semantics<arbitrary>], iteration_bounds = array<i64: 1, 1, 1>, scalar_prefetch = 0 : i64, scratch_operands = 1 : i64, tpu.core_type = #tpu.core_type<tc>, window_params = [{transform_indices = @transform_0, window_bounds = array<i64: 16, 128>}, {transform_indices = @transform_1, window_bounds = array<i64: 128, 128>}, {transform_indices = @transform_2, window_bounds = array<i64: 16, 128>}]} {
    %c0_i32 = arith.constant 0 : i32
    %0 = arith.cmpi eq, %arg2, %c0_i32 : i32
    %1 = arith.extui %0 : i1 to i32
    %c0_i32_0 = arith.constant 0 : i32
    %2 = arith.cmpi ne, %1, %c0_i32_0 : i32
    scf.if %2 {
      %cst_10 = arith.constant 0.000000e+00 : f32
      %12 = vector.broadcast %cst_10 : f32 to vector<16x128xf32>
      %c0_11 = arith.constant 0 : index
      %c0_12 = arith.constant 0 : index
      %13 = vector.load %arg6[%c0_11, %c0_12] : memref<16x128xf32, #tpu.memory_space<vmem>>, vector<16x128xf32>
      tpu.vector_store %arg6[%c0_11, %c0_12], %12 {strides = array<i32>} : memref<16x128xf32, #tpu.memory_space<vmem>>, vector<16x128xf32>,
    } else {
    }
    %c0 = arith.constant 0 : index
    %c0_1 = arith.constant 0 : index
    %3 = vector.load %arg6[%c0, %c0_1] : memref<16x128xf32, #tpu.memory_space<vmem>>, vector<16x128xf32>
    %c0_2 = arith.constant 0 : index
    %c0_3 = arith.constant 0 : index
    %4 = vector.load %arg3[%c0_2, %c0_3] : memref<16x128xbf16, #tpu.memory_space<vmem>>, vector<16x128xbf16>
    %c0_4 = arith.constant 0 : index
    %c0_5 = arith.constant 0 : index
    %5 = vector.load %arg4[%c0_4, %c0_5] : memref<128x128xbf16, #tpu.memory_space<vmem>>, vector<128x128xbf16>
    %cst = arith.constant dense<0.000000e+00> : vector<16x128xf32>
    %6 = tpu.matmul %4, %5, %cst {dimension_numbers = #tpu.dot_dimension_numbers<[1], [0], [0], [1], [0, 0, 1, 1], [], []>} : vector<16x128xbf16>, vector<128x128xbf16>, vector<16x128xf32> -> vector<16x128xf32>
    %7 = arith.addf %3, %6 : vector<16x128xf32>
    %c0_6 = arith.constant 0 : index
    %c0_7 = arith.constant 0 : index
    %8 = vector.load %arg6[%c0_6, %c0_7] : memref<16x128xf32, #tpu.memory_space<vmem>>, vector<16x128xf32>
    tpu.vector_store %arg6[%c0_6, %c0_7], %7 {strides = array<i32>} : memref<16x128xf32, #tpu.memory_space<vmem>>, vector<16x128xf32>,
    %c0_i32_8 = arith.constant 0 : i32
    %9 = arith.cmpi eq, %arg2, %c0_i32_8 : i32
    %10 = arith.extui %9 : i1 to i32
    %c0_i32_9 = arith.constant 0 : i32
    %11 = arith.cmpi ne, %10, %c0_i32_9 : i32
    scf.if %11 {
      %c0_10 = arith.constant 0 : index
      %c0_11 = arith.constant 0 : index
      %12 = vector.load %arg6[%c0_10, %c0_11] : memref<16x128xf32, #tpu.memory_space<vmem>>, vector<16x128xf32>
      %c0_12 = arith.constant 0 : index
      %c0_13 = arith.constant 0 : index
      %13 = vector.load %arg5[%c0_12, %c0_13] : memref<16x128xf32, #tpu.memory_space<vmem>>, vector<16x128xf32>
      tpu.vector_store %arg5[%c0_12, %c0_13], %12 {strides = array<i32>} : memref<16x128xf32, #tpu.memory_space<vmem>>, vector<16x128xf32>,
    } else {
    }
    return
  }
  func.func @transform_0(%arg0: i32, %arg1: i32, %arg2: i32) -> (i32, i32) {
    %c0_i32 = arith.constant 0 : i32
    return %arg0, %arg2 : i32, i32
  }
  func.func @transform_1(%arg0: i32, %arg1: i32, %arg2: i32) -> (i32, i32) {
    %c0_i32 = arith.constant 0 : i32
    return %arg2, %arg1 : i32, i32
  }
  func.func @transform_2(%arg0: i32, %arg1: i32, %arg2: i32) -> (i32, i32) {
    %c0_i32 = arith.constant 0 : i32
    return %arg0, %arg1 : i32, i32
  }
}

</mosaic_0001>

<llo_original>
// kernel: _forward_impl.1
$region0: #{_forward_impl.1}
  #allocation0 [shape = 'u32[]', space=smem, size = 0x4, offset = 0x4, fixed_abs, tag = 'smem constant byte address 0x4 - core index']
  #allocation1 [shape = 'u32[144,128]{1,0:T(1,128)}', space=vmem, size = 0x12000, scoped, tag = 'internal scratch']
  #allocation2 [shape = 'f32[16,128]{1,0:T(8,128)}', space=vmem, size = 0x2000, scoped, tag = 'scratch operand']
  %s0 = inlined_call_operand.vmem [shape: bf16[16,128], index: 0, kind: input, shape index: {}]
  %s1 = inlined_call_operand.vmem [shape: bf16[128,128], index: 1, kind: input, shape index: {}]
  %s2 = inlined_call_operand.vmem [shape: f32[16,128], index: 2, kind: output, shape index: {}]
  %s3 = sld [smem:[#allocation0]]
  $region26: #{_forward_impl.1} parent=0
    _
  %s5 = ssub.s32 1, %s3
  %s6 = scalar_select 0, %s5, %s3
  // Predicated region
  $region2: #{_forward_impl.1} parent=0 // pred_check
    _
  $region3: #{_forward_impl.1} parent=0 // pred_check_branch
    %8 = sbr.rel (0) target = $region5
  $region4: #{_forward_impl.1} parent=0 // pred_region
    _
  $region5: #{_forward_impl.1} parent=0 // pred_fallthru
    _
  // Predicated region
  $region6: #{_forward_impl.1} parent=0 // pred_check
    _
  $region7: #{_forward_impl.1} parent=0 // pred_check_branch
    %10 = sbr.rel (0) target = $region9
  $region8: #{_forward_impl.1} parent=0 // pred_region
    _
  $region9: #{_forward_impl.1} parent=0 // pred_fallthru
    _
  %p12 = scmp.eq.s32.totalorder 0, 0
  // Predicated region
  $region10: #{_forward_impl.1} parent=0 // pred_check
    %p13 = pneg %p12
  $region11: #{_forward_impl.1} parent=0 // pred_check_branch
    %15 = sbr.rel (%p13) target = $region13
  $region12: #{_forward_impl.1} parent=0 // pred_region
    %16 = vst [vmem:[#allocation2] sm:$0xff] 0.0
    %17 = vst [vmem:[#allocation2 + $0x8] sm:$0xff] 0.0
  $region13: #{_forward_impl.1} parent=0 // pred_fallthru
    _
  %v18 = vld [vmem:[#allocation2] sm:$0xff]
  %v19 = vld [vmem:[#allocation2 + $0x8] sm:$0xff]
  %v20 = vld [vmem:[%s0] sm:$0xf]
  %v21 = vld [vmem:[%s0 + $0x4] sm:$0xf]
  %v22 = vld [vmem:[%s1] sm:$0xf]
  %v23 = vld [vmem:[%s1 + $0x4] sm:$0xf]
  %v24 = vld [vmem:[%s1 + $0x8] sm:$0xf]
  %v25 = vld [vmem:[%s1 + $0xc] sm:$0xf]
  %v26 = vld [vmem:[%s1 + $0x10] sm:$0xf]
  %v27 = vld [vmem:[%s1 + $0x14] sm:$0xf]
  %v28 = vld [vmem:[%s1 + $0x18] sm:$0xf]
  %v29 = vld [vmem:[%s1 + $0x1c] sm:$0xf]
  %v30 = vld [vmem:[%s1 + $0x20] sm:$0xf]
  %v31 = vld [vmem:[%s1 + $0x24] sm:$0xf]
  %v32 = vld [vmem:[%s1 + $0x28] sm:$0xf]
  %v33 = vld [vmem:[%s1 + $0x2c] sm:$0xf]
  %v34 = vld [vmem:[%s1 + $0x30] sm:$0xf]
  %v35 = vld [vmem:[%s1 + $0x34] sm:$0xf]
  %v36 = vld [vmem:[%s1 + $0x38] sm:$0xf]
  %v37 = vld [vmem:[%s1 + $0x3c] sm:$0xf]
  %v40 = vunpack.c.l.b16 %v20
  %v41 = vunpack.c.l.b16 %v21
  %v42 = vpack.c.b16 %v41, %v40
  %v60 = vunpack.c.l.b16 %v22
  %v61 = vunpack.c.l.b16 %v23
  %v62 = vunpack.c.l.b16 %v24
  %v63 = vunpack.c.l.b16 %v25
  %v64 = vunpack.c.l.b16 %v26
  %v65 = vunpack.c.l.b16 %v27
  %v66 = vunpack.c.l.b16 %v28
  %v67 = vunpack.c.l.b16 %v29
  %v68 = vunpack.c.l.b16 %v30
  %v69 = vunpack.c.l.b16 %v31
  %v70 = vunpack.c.l.b16 %v32
  %v71 = vunpack.c.l.b16 %v33
  %v72 = vunpack.c.l.b16 %v34
  %v73 = vunpack.c.l.b16 %v35
  %v74 = vunpack.c.l.b16 %v36
  %v75 = vunpack.c.l.b16 %v37
  %v76 = vpack.c.b16 %v61, %v60
  %v77 = vpack.c.b16 %v63, %v62
  %v78 = vpack.c.b16 %v65, %v64
  %v79 = vpack.c.b16 %v67, %v66
  %v80 = vpack.c.b16 %v69, %v68
  %v81 = vpack.c.b16 %v71, %v70
  %v82 = vpack.c.b16 %v73, %v72
  %v83 = vpack.c.b16 %v75, %v74
  %92 = vmatprep.subr.bf16.mxu0 0
  %93 = vmatpush1.bf16.msra.mxu0 %v83
  %94 = vmatprep.subr.bf16.mxu0 0
  %95 = vmatpush1.bf16.msra.mxu0 %v82
  %96 = vmatprep.subr.bf16.mxu0 0
  %97 = vmatpush1.bf16.msra.mxu0 %v81
  %98 = vmatprep.subr.bf16.mxu0 0
  %99 = vmatpush1.bf16.msra.mxu0 %v80
  %100 = vmatprep.subr.bf16.mxu0 0
  %101 = vmatpush1.bf16.msra.mxu0 %v79
  %102 = vmatprep.subr.bf16.mxu0 0
  %103 = vmatpush1.bf16.msra.mxu0 %v78
  %104 = vmatprep.subr.bf16.mxu0 0
  %105 = vmatpush1.bf16.msra.mxu0 %v77
  %106 = vmatprep.subr.bf16.mxu0 0
  %107 = vmatpush1.bf16.msra.mxu0 %v76
  %108 = vmatprep.subr.bf16.mxu0 0
  %109 = vmatpush2.bf16.msra.mxu0 0
  %110 = vmatprep.subr.bf16.mxu0 0
  %111 = vmatpush2.bf16.msra.mxu0 0
  %112 = vmatprep.subr.bf16.mxu0 0
  %113 = vmatpush2.bf16.msra.mxu0 0
  %114 = vmatprep.subr.bf16.mxu0 0
  %115 = vmatpush2.bf16.msra.mxu0 0
  %116 = vmatprep.subr.bf16.mxu0 0
  %117 = vmatpush2.bf16.msra.mxu0 0
  %118 = vmatprep.subr.bf16.mxu0 0
  %119 = vmatpush2.bf16.msra.mxu0 0
  %120 = vmatprep.subr.bf16.mxu0 0
  %121 = vmatpush2.bf16.msra.mxu0 0
  %122 = vmatprep.subr.bf16.mxu0 0
  %123 = vmatpush2.bf16.msra.mxu0 0
  %124 = vmatprep.mubr.bf16.mxu0 0
  %125 = vmatmul.mubr.bf16.gmra.mxu0 %v42
  %v126 = vpop.f32.mrf.mxu0
  %v127 = vadd.f32 0.0, %v126
  %v128 = vpop.f32.mrf.mxu0
  %v129 = vpop.f32.mrf.mxu0
  %v130 = vadd.f32 0.0, %v129
  %v131 = vpop.f32.mrf.mxu0
  %132 = vdwg.mxu0
  %v133 = vadd.f32 %v18, %v127
  %v134 = vadd.f32 %v19, %v130
  %135 = vst [vmem:[#allocation2] sm:$0xff] %v133
  %136 = vst [vmem:[#allocation2 + $0x8] sm:$0xff] %v134
  // Predicated region
  $region14: #{_forward_impl.1} parent=0 // pred_check
    %p137 = pneg %p12
  $region15: #{_forward_impl.1} parent=0 // pred_check_branch
    %139 = sbr.rel (%p137) target = $region17
  $region16: #{_forward_impl.1} parent=0 // pred_region
    %v140 = vld [vmem:[#allocation2] sm:$0xff]
    %v141 = vld [vmem:[#allocation2 + $0x8] sm:$0xff]
    %142 = vst [vmem:[%s2] sm:$0xff] %v140
    %143 = vst [vmem:[%s2 + $0x8] sm:$0xff] %v141
  $region17: #{_forward_impl.1} parent=0 // pred_fallthru
    _
  // Predicated region
  $region18: #{_forward_impl.1} parent=0 // pred_check
    _
  $region19: #{_forward_impl.1} parent=0 // pred_check_branch
    %145 = sbr.rel (0) target = $region21
  $region20: #{_forward_impl.1} parent=0 // pred_region
    _
  $region21: #{_forward_impl.1} parent=0 // pred_fallthru
    _
  // Predicated region
  $region22: #{_forward_impl.1} parent=0 // pred_check
    _
  $region23: #{_forward_impl.1} parent=0 // pred_check_branch
    %147 = sbr.rel (0) target = $region25
  $region24: #{_forward_impl.1} parent=0 // pred_region
    _
  $region25: #{_forward_impl.1} parent=0 // pred_fallthru
    _

</llo_original>
